<compile_context>
chip_gen: v5e
topology: v5e:2x2
jax: 0.10.0
libtpu: 0.0.40
codegen_flags: <defaults>
</compile_context>

<pallas_src>
import jax
import jax.numpy as jnp
from jax.experimental import pallas as pl
from jax.experimental.pallas import tpu as pltpu


def _mlp_vpu_kernel(x_ref, w1_ref, b1_ref, w2_ref, b2_ref, o_ref):
    """Degenerate case (F == 1, O == 1): pure VPU/XLU, no MXU round trip.

    Shapes (lane-dense, batch on the lane axis):
      x_ref : (1, B)   w1_ref : (H, 1)   b1_ref : (H, 1)
      w2_ref: (H, 1)   b2_ref : (1, 1)   o_ref  : (1, B)
    """
    x = x_ref[...]                                        # (1, B)
    # Layer 1: outer product + bias (per-sublane constant) + ReLU, all on VPU.
    h = jnp.maximum(w1_ref[...] * x + b1_ref[...], 0.0)   # (H, B)
    # Layer 2: weighted sum over H (broadcast multiply + sublane reduce on XLU).
    y = jnp.sum(w2_ref[...] * h, axis=0, keepdims=True)   # (1, B)
    o_ref[...] = (y + b2_ref[...]).astype(o_ref.dtype)


def _mlp_mxu_kernel(x_ref, w1_ref, b1_ref, w2_ref, b2_ref, o_ref):
    """General lane-dense path (batch on the lane axis of every operand).

    Shapes:
      x_ref : (F, B)   w1_ref : (H, F)   b1_ref : (H, 1)
      w2_ref: (O, H)   b2_ref : (O, 1)   o_ref  : (O, B)
    """
    h = jnp.dot(w1_ref[...], x_ref[...], preferred_element_type=jnp.float32)
    h = jnp.maximum(h + b1_ref[...], 0.0)                 # (H, B)
    y = jnp.dot(w2_ref[...], h, preferred_element_type=jnp.float32)
    o_ref[...] = (y + b2_ref[...]).astype(o_ref.dtype)    # (O, B)


def net_forward(x, w1, b1, w2, b2):
    """Forward pass of Net with PyTorch-layout parameters.

    x : (B, F);  w1 : (H, F);  b1 : (H,);  w2 : (O, H);  b2 : (O,)  ->  (B, O)
    Computes relu(x @ w1.T + b1) @ w2.T + b2, matching nn.Linear semantics.
    """
    B, F = x.shape
    H = w1.shape[0]
    O = w2.shape[0]

    xT = x.T                          # (F, B): batch on the 128-lane axis
    b1_col = b1.reshape(H, 1)
    b2_col = b2.reshape(O, 1)

    vmem_spec = pl.BlockSpec(memory_space=pltpu.MemorySpace.VMEM)
    out_shape = jax.ShapeDtypeStruct((O, B), x.dtype)

    if F == 1 and O == 1:
        # Degenerate contraction dims -> skip the MXU entirely (VPU + XLU only).
        w1_col = w1.reshape(H, 1)
        w2_col = w2.reshape(H, 1)
        yT = pl.pallas_call(
            _mlp_vpu_kernel,
            out_shape=out_shape,
            in_specs=[vmem_spec] * 5,
            out_specs=vmem_spec,
        )(xT, w1_col, b1_col, w2_col, b2_col)
    else:
        yT = pl.pallas_call(
            _mlp_mxu_kernel,
            out_shape=out_shape,
            in_specs=[vmem_spec] * 5,
            out_specs=vmem_spec,
        )(xT, w1, b1_col, w2, b2_col)

    return yT.T                       # (B, O)


if __name__ == "__main__":
    # Shapes mirror the reference script: x = linspace(-1, 1, 100)[:, None],
    # Net(n_feature=1, n_hidden=32, n_outdden=1).
    n_feature, n_hidden, n_out = 1, 32, 1
    batch = 100

    key = jax.random.PRNGKey(0)
    k1, k2, k3, k4 = jax.random.split(key, 4)

    # PyTorch nn.Linear weight layout: (out_features, in_features).
    w1 = jax.random.normal(k1, (n_hidden, n_feature), dtype=jnp.float32) * 0.5
    b1 = jax.random.normal(k2, (n_hidden,), dtype=jnp.float32) * 0.1
    w2 = jax.random.normal(k3, (n_out, n_hidden), dtype=jnp.float32) * 0.5
    b2 = jax.random.normal(k4, (n_out,), dtype=jnp.float32) * 0.1

    x = jnp.expand_dims(jnp.linspace(-1.0, 1.0, batch, dtype=jnp.float32), 1)

    out = jax.block_until_ready(net_forward(x, w1, b1, w2, b2))
    ref = jnp.maximum(x @ w1.T + b1, 0.0) @ w2.T + b2
    assert out.shape == (batch, n_out)
    assert jnp.allclose(out, ref, atol=1e-5, rtol=1e-5)

    # Also exercise the general (non-degenerate) lane-dense MXU path.
    kw1, kb1, kw2, kb2, kx = jax.random.split(jax.random.PRNGKey(1), 5)
    F2, H2, O2, B2 = 8, 32, 4, 64
    w1g = jax.random.normal(kw1, (H2, F2), dtype=jnp.float32) * 0.1
    b1g = jax.random.normal(kb1, (H2,), dtype=jnp.float32) * 0.1
    w2g = jax.random.normal(kw2, (O2, H2), dtype=jnp.float32) * 0.1
    b2g = jax.random.normal(kb2, (O2,), dtype=jnp.float32) * 0.1
    xg = jax.random.normal(kx, (B2, F2), dtype=jnp.float32)
    outg = jax.block_until_ready(net_forward(xg, w1g, b1g, w2g, b2g))
    refg = jnp.maximum(xg @ w1g.T + b1g, 0.0) @ w2g.T + b2g
    assert jnp.allclose(outg, refg, atol=1e-4, rtol=1e-4)

    print("KERNEL_OK")
</pallas_src>

<mosaic_0001>
module attributes {stable_mosaic.version = 11 : i64} {
  func.func @_mlp_vpu_kernel(%arg0: memref<1x100xf32, #tpu.memory_space<vmem>>, %arg1: memref<32x1xf32, #tpu.memory_space<vmem>>, %arg2: memref<32x1xf32, #tpu.memory_space<vmem>>, %arg3: memref<32x1xf32, #tpu.memory_space<vmem>>, %arg4: memref<1x1xf32, #tpu.memory_space<vmem>>, %arg5: memref<1x100xf32, #tpu.memory_space<vmem>>) attributes {dimension_semantics = [], scalar_prefetch = 0 : i64, scratch_operands = 0 : i64, tpu.core_type = #tpu.core_type<tc>} {
    %c0 = arith.constant 0 : index
    %c0_0 = arith.constant 0 : index
    %0 = vector.load %arg0[%c0, %c0_0] : memref<1x100xf32, #tpu.memory_space<vmem>>, vector<1x100xf32>
    %c0_1 = arith.constant 0 : index
    %c0_2 = arith.constant 0 : index
    %1 = vector.load %arg1[%c0_1, %c0_2] : memref<32x1xf32, #tpu.memory_space<vmem>>, vector<32x1xf32>
    %2 = vector.broadcast %1 : vector<32x1xf32> to vector<32x100xf32>
    %3 = vector.broadcast %0 : vector<1x100xf32> to vector<32x100xf32>
    %4 = arith.mulf %2, %3 : vector<32x100xf32>
    %c0_3 = arith.constant 0 : index
    %c0_4 = arith.constant 0 : index
    %5 = vector.load %arg2[%c0_3, %c0_4] : memref<32x1xf32, #tpu.memory_space<vmem>>, vector<32x1xf32>
    %6 = vector.broadcast %5 : vector<32x1xf32> to vector<32x100xf32>
    %7 = arith.addf %4, %6 : vector<32x100xf32>
    %cst = arith.constant 0.000000e+00 : f32
    %8 = vector.broadcast %cst : f32 to vector<32x100xf32>
    %9 = arith.maximumf %7, %8 : vector<32x100xf32>
    %c0_5 = arith.constant 0 : index
    %c0_6 = arith.constant 0 : index
    %10 = vector.load %arg3[%c0_5, %c0_6] : memref<32x1xf32, #tpu.memory_space<vmem>>, vector<32x1xf32>
    %11 = vector.broadcast %10 : vector<32x1xf32> to vector<32x100xf32>
    %12 = arith.mulf %11, %9 : vector<32x100xf32>
    %cst_7 = arith.constant dense<0.000000e+00> : vector<100xf32>
    %13 = vector.multi_reduction <add>, %12, %cst_7 [0] : vector<32x100xf32> to vector<100xf32>
    %14 = vector.shape_cast %13 : vector<100xf32> to vector<1x100xf32>
    %c0_8 = arith.constant 0 : index
    %c0_9 = arith.constant 0 : index
    %15 = vector.load %arg4[%c0_8, %c0_9] : memref<1x1xf32, #tpu.memory_space<vmem>>, vector<1x1xf32>
    %16 = vector.broadcast %15 : vector<1x1xf32> to vector<1x100xf32>
    %17 = arith.addf %14, %16 : vector<1x100xf32>
    %c0_10 = arith.constant 0 : index
    %c0_11 = arith.constant 0 : index
    %18 = vector.load %arg5[%c0_10, %c0_11] : memref<1x100xf32, #tpu.memory_space<vmem>>, vector<1x100xf32>
    tpu.vector_store %arg5[%c0_10, %c0_11], %17 {strides = array<i32>} : memref<1x100xf32, #tpu.memory_space<vmem>>, vector<1x100xf32>,
    return
  }
}

</mosaic_0001>

<llo_original>
// kernel: tpu_custom_call.1
$region0: #{tpu_custom_call.1}
  #allocation0 [shape = 'u32[]', space=smem, size = 0x4, offset = 0x4, fixed_abs, tag = 'smem constant byte address 0x4 - core index']
  #allocation1 [shape = 'u32[72,128]{1,0:T(1,128)}', space=vmem, size = 0x9000, scoped, tag = 'internal scratch']
  #allocation2 [shape = 'f32[1,1]{1,0:T(1,128)S(1)}', space=vmem, size = 0x200, scoped, tag = 'scoped memory for tpu_custom_call.1']
  %s0 = inlined_call_operand.vmem [shape: f32[1,100], index: 0, kind: input, shape index: {}]
  %s1 = inlined_call_operand.vmem [shape: f32[32,1], index: 1, kind: input, shape index: {}]
  %s2 = inlined_call_operand.vmem [shape: f32[32,1], index: 2, kind: input, shape index: {}]
  %s3 = inlined_call_operand.vmem [shape: f32[32,1], index: 3, kind: input, shape index: {}]
  %s4 = inlined_call_operand.<no memory space> [shape: f32[1,1], index: 4, kind: input, shape index: {}]
  %s5 = inlined_call_operand.hbm [shape: f32[1,100], index: 5, kind: output, shape index: {}]
  %s6 = sld [smem:[#allocation0]]
  $region30: #{tpu_custom_call.1} parent=0
    _
  %s8 = ssub.s32 1, %s6
  %s9 = scalar_select 0, %s8, %s6
  %v10 = vstv %s4
  %11 = vst [vmem:[#allocation2] sm:$0x1] %v10
  $region1: #{tpu_custom_call.1} parent=0
    #allocation3 [shape = 'u8[512]{0}', space=vmem, size = 0x400, scoped, tag = 'output window, operand 0, single buffered']
    #allocation4 [shape = 's32[1]{0}', space=sflag, size = 0x4, scoped, tag = 'scoped memory for tpu_custom_call.1']
    %12 = vsyncpa [#allocation4], 0
    // Predicated region
    $region2: #{tpu_custom_call.1} parent=1 // pred_check
      _
    $region3: #{tpu_custom_call.1} parent=1 // pred_check_branch
      %14 = sbr.rel (0) target = $region5
    $region4: #{tpu_custom_call.1} parent=1 // pred_region
      _
    $region5: #{tpu_custom_call.1} parent=1 // pred_fallthru
      _
    // Predicated region
    $region6: #{tpu_custom_call.1} parent=1 // pred_check
      _
    $region7: #{tpu_custom_call.1} parent=1 // pred_check_branch
      %16 = sbr.rel (0) target = $region9
    $region8: #{tpu_custom_call.1} parent=1 // pred_region
      _
    $region9: #{tpu_custom_call.1} parent=1 // pred_fallthru
      _
    // Predicated region
    $region10: #{tpu_custom_call.1} parent=1 // pred_check
      _
    $region11: #{tpu_custom_call.1} parent=1 // pred_check_branch
      %18 = sbr.rel (0) target = $region13
    $region12: #{tpu_custom_call.1} parent=1 // pred_region
      _
    $region13: #{tpu_custom_call.1} parent=1 // pred_fallthru
      _
    // Predicated region
    $region14: #{tpu_custom_call.1} parent=1 // pred_check
      _
    $region15: #{tpu_custom_call.1} parent=1 // pred_check_branch
      %20 = sbr.rel (0) target = $region17
    $region16: #{tpu_custom_call.1} parent=1 // pred_region
      _
    $region17: #{tpu_custom_call.1} parent=1 // pred_fallthru
      _
    // Predicated region
    $region18: #{tpu_custom_call.1} parent=1 // pred_check
      _
    $region19: #{tpu_custom_call.1} parent=1 // pred_check_branch
      %22 = sbr.rel (0) target = $region21
    $region20: #{tpu_custom_call.1} parent=1 // pred_region
      _
    $region21: #{tpu_custom_call.1} parent=1 // pred_fallthru
      _
    %v23 = vld [vmem:[%s0] sm:$0x1]
    %v24 = vld [vmem:[%s1] sm:$0xff]
    %v25 = vld [vmem:[%s1 + $0x8] sm:$0xff]
    %v26 = vld [vmem:[%s1 + $0x10] sm:$0xff]
    %v27 = vld [vmem:[%s1 + $0x18] sm:$0xff]
    %29 = vset.pattern.permute.xlu0 0
    %30 = vperm.xlu0 %29, %v24
    %v31 = vpop.permute.xlu0 %30
    %34 = vset.pattern.permute.xlu0 0
    %35 = vperm.xlu0 %34, %v25
    %v36 = vpop.permute.xlu0 %35
    %39 = vset.pattern.permute.xlu0 0
    %40 = vperm.xlu0 %39, %v26
    %v41 = vpop.permute.xlu0 %40
    %44 = vset.pattern.permute.xlu0 0
    %45 = vperm.xlu0 %44, %v27
    %v46 = vpop.permute.xlu0 %45
    %v49 = vperm.slane %v23, 0
    %v51 = vmul.f32 %v31, %v49
    %v52 = vmul.f32 %v36, %v49
    %v53 = vmul.f32 %v41, %v49
    %v54 = vmul.f32 %v46, %v49
    %v55 = vld [vmem:[%s2] sm:$0xff]
    %v56 = vld [vmem:[%s2 + $0x8] sm:$0xff]
    %v57 = vld [vmem:[%s2 + $0x10] sm:$0xff]
    %v58 = vld [vmem:[%s2 + $0x18] sm:$0xff]
    %60 = vset.pattern.permute.xlu0 0
    %61 = vperm.xlu0 %60, %v55
    %v62 = vpop.permute.xlu0 %61
    %65 = vset.pattern.permute.xlu0 0
    %66 = vperm.xlu0 %65, %v56
    %v67 = vpop.permute.xlu0 %66
    %70 = vset.pattern.permute.xlu0 0
    %71 = vperm.xlu0 %70, %v57
    %v72 = vpop.permute.xlu0 %71
    %75 = vset.pattern.permute.xlu0 0
    %76 = vperm.xlu0 %75, %v58
    %v77 = vpop.permute.xlu0 %76
    %v79 = vadd.f32 %v51, %v62
    %v80 = vadd.f32 %v52, %v67
    %v81 = vadd.f32 %v53, %v72
    %v82 = vadd.f32 %v54, %v77
    %v83 = vmax.f32 %v79, 0.0
    %v84 = vmax.f32 %v80, 0.0
    %v85 = vmax.f32 %v81, 0.0
    %v86 = vmax.f32 %v82, 0.0
    %v87 = vld [vmem:[%s3] sm:$0xff]
    %v88 = vld [vmem:[%s3 + $0x8] sm:$0xff]
    %v89 = vld [vmem:[%s3 + $0x10] sm:$0xff]
    %v90 = vld [vmem:[%s3 + $0x18] sm:$0xff]
    %92 = vset.pattern.permute.xlu0 0
    %93 = vperm.xlu0 %92, %v87
    %v94 = vpop.permute.xlu0 %93
    %97 = vset.pattern.permute.xlu0 0
    %98 = vperm.xlu0 %97, %v88
    %v99 = vpop.permute.xlu0 %98
    %102 = vset.pattern.permute.xlu0 0
    %103 = vperm.xlu0 %102, %v89
    %v104 = vpop.permute.xlu0 %103
    %107 = vset.pattern.permute.xlu0 0
    %108 = vperm.xlu0 %107, %v90
    %v109 = vpop.permute.xlu0 %108
    %v111 = vmul.f32 %v94, %v83
    %v112 = vmul.f32 %v99, %v84
    %v113 = vmul.f32 %v104, %v85
    %v114 = vmul.f32 %v109, %v86
    %vm115 = vcmask 818176
    %v116 = vsel %vm115, %v111, 0.0
    %v117 = vsel %vm115, %v112, 0.0
    %v118 = vadd.f32 %v116, %v117
    %v119 = vsel %vm115, %v113, 0.0
    %v120 = vadd.f32 %v118, %v119
    %v121 = vsel %vm115, %v114, 0.0
    %v122 = vadd.f32 %v120, %v121
    %v123 = vrot.slane %v122, 4
    %v124 = vadd.f32 %v122, %v123
    %v125 = vrot.slane %v124, 2
    %v126 = vadd.f32 %v124, %v125
    %v127 = vrot.slane %v126, 1
    %v128 = vadd.f32 %v126, %v127
    %v129 = vld [vmem:[#allocation2] sm:$0x1]
    %131 = vset.pattern.permute.xlu0 0
    %132 = vperm.xlu0 %131, %v129
    %v133 = vpop.permute.xlu0 %132
    %v135 = vperm.slane %v133, 0
    %v136 = vadd.f32 %v128, %v135
    %vm137 = vcmask 811008
    %138 = vst.msk [vmem:[#allocation3] sm:$0x1] %vm137, %v136
    // Predicated region
    $region22: #{tpu_custom_call.1} parent=1 // pred_check
      _
    $region23: #{tpu_custom_call.1} parent=1 // pred_check_branch
      %140 = sbr.rel (0) target = $region25
    $region24: #{tpu_custom_call.1} parent=1 // pred_region
      %142 = vsyncadd [#allocation4], 0
      %s144 = sshll.u32 [#allocation3], 4
      %s145 = int_to_ptr.vmem [resolvable:$true] %s144
      %s146 = sshll.u32 %s5, 4
      %s147 = int_to_ptr.hbm [resolvable:$true] %s146
      %149 = dma.vmem_to_hbm [thread:$0]  %s145, 16, %s147, [#allocation4]
    $region25: #{tpu_custom_call.1} parent=1 // pred_fallthru
      _
    // Predicated region
    $region26: #{tpu_custom_call.1} parent=1 // pred_check
      _
    $region27: #{tpu_custom_call.1} parent=1 // pred_check_branch
      %151 = sbr.rel (0) target = $region29
    $region28: #{tpu_custom_call.1} parent=1 // pred_region
      %153 = dma.done [#allocation4], 16
    $region29: #{tpu_custom_call.1} parent=1 // pred_fallthru
      _
    %154 = vsyncpa [#allocation4], 1

</llo_original>
